<compile_context>
chip_gen: v7x
topology: tpu7x:2x2x1
jax: 0.10.0
libtpu: 0.0.40
codegen_flags: <defaults>
</compile_context>

<pallas_src>
import functools

import jax
import jax.numpy as jnp
from jax.experimental import pallas as pl
from jax.experimental.pallas import tpu as pltpu


def _gemm_bn_lrelu_kernel(w_ref, x_ref, shift_ref, o_ref):
    # w_ref     : (Cout, K)       folded conv weight (BN scale absorbed), bf16
    # x_ref     : (K, TILE_M)     im2col patches, lane-dense, bf16
    # shift_ref : (Cout, 1)       folded BN + conv-bias shift, f32
    # o_ref     : (Cout, TILE_M)  output block, lane-dense, f32
    acc = jnp.dot(w_ref[...], x_ref[...], preferred_element_type=jnp.float32)
    y = acc + shift_ref[...]                       # broadcast over lanes
    o_ref[...] = jnp.where(y > 0, y, 0.1 * y).astype(o_ref.dtype)


def _pick_tile_m(M):
    # Lane-dense tile (multiple of 128); prefer >=2 grid steps (v7x has 2 TCs),
    # while keeping steps big enough that the ~0.35us/step overhead is negligible.
    for t in (512, 256, 128):
        if M % t == 0 and M // t >= 2:
            return t
    return M  # single full-extent block fallback


@functools.partial(jax.jit, static_argnames=("stride", "padding", "eps"))
def conv_block(x_nchw, weight_oihw, bias, gamma, beta, run_mean, run_var,
               *, stride=1, padding=0, eps=1e-5):
    compute_dtype = jnp.bfloat16  # MXU operands; accumulation & epilogue stay f32

    # ---- plain-JAX glue: layout, padding, im2col, BN folding ----
    x = jnp.transpose(x_nchw, (0, 2, 3, 1)).astype(jnp.float32)       # NCHW -> NHWC
    w = jnp.transpose(weight_oihw, (2, 3, 1, 0)).astype(jnp.float32)  # OIHW -> HWIO
    N, H, W, Cin = x.shape
    KH, KW, _, Cout = w.shape
    xp = jnp.pad(x, ((0, 0), (padding, padding), (padding, padding), (0, 0)))
    Hp, Wp = H + 2 * padding, W + 2 * padding
    Ho = (Hp - KH) // stride + 1
    Wo = (Wp - KW) // stride + 1
    M = N * Ho * Wo
    K = KH * KW * Cin

    # im2col (stride handled here once, so the kernel only sees contiguous loads)
    taps = []
    for kh in range(KH):
        for kw in range(KW):
            taps.append(xp[:, kh:kh + (Ho - 1) * stride + 1:stride,
                              kw:kw + (Wo - 1) * stride + 1:stride, :])
    cols = jnp.stack(taps, axis=3)                 # (N, Ho, Wo, KH*KW, Cin)
    xt = cols.reshape(M, K).T.astype(compute_dtype)  # (K, M): lane axis = M (dense)

    # BatchNorm2d (eval / running stats) folded with the conv bias:
    #   bn(conv(x) + b) = scale*conv(x) + (beta + scale*(b - mean))
    # `scale` is folded into the weights; the kernel epilogue is a single add.
    scale = gamma / jnp.sqrt(run_var + eps)                           # (Cout,)
    shift = (beta + scale * (bias - run_mean)).astype(jnp.float32)    # (Cout,)
    w_mat = w.reshape(K, Cout) * scale[None, :]                       # scale folded
    wt = w_mat.T.astype(compute_dtype)                                # (Cout, K)
    shift2 = shift.reshape(Cout, 1)
    # TODO(synk): PyTorch BatchNorm2d in .train() mode uses per-batch statistics;
    # this kernel implements the deterministic eval-mode (running-stats) semantics.

    TILE_M = _pick_tile_m(M)
    grid = (M // TILE_M,)

    out_cm = pl.pallas_call(
        _gemm_bn_lrelu_kernel,
        out_shape=jax.ShapeDtypeStruct((Cout, M), jnp.float32),
        grid_spec=pltpu.PrefetchScalarGridSpec(
            num_scalar_prefetch=0,
            grid=grid,
            in_specs=[
                pl.BlockSpec((Cout, K), lambda i: (0, 0)),       # weights (resident)
                pl.BlockSpec((K, TILE_M), lambda i: (0, i)),     # im2col patch slab
                pl.BlockSpec((Cout, 1), lambda i: (0, 0)),       # shift (resident)
            ],
            out_specs=pl.BlockSpec((Cout, TILE_M), lambda i: (0, i)),
        ),
        compiler_params=pltpu.CompilerParams(
            dimension_semantics=("parallel",)),
    )(wt, xt, shift2)

    # (Cout, N*Ho*Wo) -> (N, Cout, Ho, Wo)  : channel-major result maps straight to NCHW
    out = out_cm.reshape(Cout, N, Ho, Wo).transpose(1, 0, 2, 3)
    return out.astype(x_nchw.dtype)


if __name__ == "__main__":
    # ConvBlock(in_channels=4, out_channels=8, kernel_size=3, stride=1, padding=1)
    in_channels, out_channels, kernel_size, stride, padding = 4, 8, 3, 1, 1
    N, H, W = 2, 16, 16

    key = jax.random.PRNGKey(0)
    k_x, k_w, k_b, k_g, k_be, k_m, k_v = jax.random.split(key, 7)

    x = jax.random.normal(k_x, (N, in_channels, H, W), jnp.float32)          # NCHW
    weight = 0.1 * jax.random.normal(
        k_w, (out_channels, in_channels, kernel_size, kernel_size), jnp.float32)  # OIHW
    bias = 0.1 * jax.random.normal(k_b, (out_channels,), jnp.float32)
    gamma = 1.0 + 0.1 * jax.random.normal(k_g, (out_channels,), jnp.float32)
    beta = 0.1 * jax.random.normal(k_be, (out_channels,), jnp.float32)
    run_mean = 0.1 * jax.random.normal(k_m, (out_channels,), jnp.float32)
    run_var = jnp.abs(1.0 + 0.1 * jax.random.normal(k_v, (out_channels,), jnp.float32))

    out = conv_block(x, weight, bias, gamma, beta, run_mean, run_var,
                     stride=stride, padding=padding)
    jax.block_until_ready(out)

    # sanity: plain-JAX reference using the same bf16-rounded operands (f32 accumulation)
    eps = 1e-5
    scale = gamma / jnp.sqrt(run_var + eps)
    shift = beta + scale * (bias - run_mean)
    xb = x.astype(jnp.bfloat16).astype(jnp.float32)
    w_fold = jnp.transpose(weight, (2, 3, 1, 0)) * scale.reshape(1, 1, 1, -1)
    wb = w_fold.astype(jnp.bfloat16).astype(jnp.float32)
    ref = jax.lax.conv_general_dilated(
        jnp.transpose(xb, (0, 2, 3, 1)), wb,
        window_strides=(stride, stride),
        padding=[(padding, padding), (padding, padding)],
        dimension_numbers=("NHWC", "HWIO", "NHWC")) + shift
    ref = jnp.where(ref > 0, ref, 0.1 * ref)
    ref = jnp.transpose(ref, (0, 3, 1, 2))

    assert out.shape == (N, out_channels, H, W)
    assert jnp.allclose(out, ref, atol=2e-4, rtol=1e-3), \
        float(jnp.max(jnp.abs(out - ref)))

    print("KERNEL_OK")
</pallas_src>

<mosaic_0001>
module attributes {stable_mosaic.version = 11 : i64} {
  func.func @_gemm_bn_lrelu_kernel(%arg0: i32, %arg1: memref<8x36xbf16, #tpu.memory_space<vmem>>, %arg2: memref<36x256xbf16, #tpu.memory_space<vmem>>, %arg3: memref<8x1xf32, #tpu.memory_space<vmem>>, %arg4: memref<8x256xf32, #tpu.memory_space<vmem>>) attributes {dimension_semantics = [#tpu.dimension_semantics<parallel>], iteration_bounds = array<i64: 2>, scalar_prefetch = 0 : i64, scratch_operands = 0 : i64, tpu.core_type = #tpu.core_type<tc>, window_params = [{pipeline_mode = #tpu.pipeline_mode<synchronous>, transform_indices = @transform_0, window_bounds = array<i64: 8, 36>}, {transform_indices = @transform_1, window_bounds = array<i64: 36, 256>}, {pipeline_mode = #tpu.pipeline_mode<synchronous>, transform_indices = @transform_2, window_bounds = array<i64: 8, 1>}, {transform_indices = @transform_3, window_bounds = array<i64: 8, 256>}]} {
    %c0 = arith.constant 0 : index
    %c0_0 = arith.constant 0 : index
    %0 = vector.load %arg1[%c0, %c0_0] : memref<8x36xbf16, #tpu.memory_space<vmem>>, vector<8x36xbf16>
    %c0_1 = arith.constant 0 : index
    %c0_2 = arith.constant 0 : index
    %1 = vector.load %arg2[%c0_1, %c0_2] : memref<36x256xbf16, #tpu.memory_space<vmem>>, vector<36x256xbf16>
    %cst = arith.constant dense<0.000000e+00> : vector<8x256xf32>
    %2 = tpu.matmul %0, %1, %cst {dimension_numbers = #tpu.dot_dimension_numbers<[1], [0], [0], [1], [0, 0, 1, 1], [], []>} : vector<8x36xbf16>, vector<36x256xbf16>, vector<8x256xf32> -> vector<8x256xf32>
    %c0_3 = arith.constant 0 : index
    %c0_4 = arith.constant 0 : index
    %3 = vector.load %arg3[%c0_3, %c0_4] : memref<8x1xf32, #tpu.memory_space<vmem>>, vector<8x1xf32>
    %4 = vector.broadcast %3 : vector<8x1xf32> to vector<8x256xf32>
    %5 = arith.addf %2, %4 : vector<8x256xf32>
    %cst_5 = arith.constant 0.000000e+00 : f32
    %6 = vector.broadcast %cst_5 : f32 to vector<8x256xf32>
    %7 = arith.cmpf ogt, %5, %6 : vector<8x256xf32>
    %cst_6 = arith.constant 1.000000e-01 : f32
    %8 = vector.broadcast %cst_6 : f32 to vector<8x256xf32>
    %9 = arith.mulf %8, %5 : vector<8x256xf32>
    %10 = arith.select %7, %5, %9 : vector<8x256xi1>, vector<8x256xf32>
    %c0_7 = arith.constant 0 : index
    %c0_8 = arith.constant 0 : index
    %11 = vector.load %arg4[%c0_7, %c0_8] : memref<8x256xf32, #tpu.memory_space<vmem>>, vector<8x256xf32>
    tpu.vector_store %arg4[%c0_7, %c0_8], %10 {strides = array<i32>} : memref<8x256xf32, #tpu.memory_space<vmem>>, vector<8x256xf32>,
    return
  }
  func.func @transform_0(%arg0: i32) -> (i32, i32) {
    %c0_i32 = arith.constant 0 : i32
    %c0_i32_0 = arith.constant 0 : i32
    %c0_i32_1 = arith.constant 0 : i32
    return %c0_i32, %c0_i32_0 : i32, i32
  }
  func.func @transform_1(%arg0: i32) -> (i32, i32) {
    %c0_i32 = arith.constant 0 : i32
    %c0_i32_0 = arith.constant 0 : i32
    return %c0_i32, %arg0 : i32, i32
  }
  func.func @transform_2(%arg0: i32) -> (i32, i32) {
    %c0_i32 = arith.constant 0 : i32
    %c0_i32_0 = arith.constant 0 : i32
    %c0_i32_1 = arith.constant 0 : i32
    return %c0_i32, %c0_i32_0 : i32, i32
  }
  func.func @transform_3(%arg0: i32) -> (i32, i32) {
    %c0_i32 = arith.constant 0 : i32
    %c0_i32_0 = arith.constant 0 : i32
    return %c0_i32, %arg0 : i32, i32
  }
}

</mosaic_0001>

<llo_original>
// kernel: conv_block.1
$region0: #{conv_block.1}
  #allocation0 [shape = 'u32[]', space=smem, size = 0x4, offset = 0x4, fixed_abs, tag = 'smem constant byte address 0x4 - core index']
  #allocation1 [shape = 'u32[144,128]{1,0:T(1,128)}', space=vmem, size = 0x12000, scoped, tag = 'internal scratch']
  %s0 = inlined_call_operand.vmem [shape: bf16[8,36], index: 0, kind: input, shape index: {}]
  %s1 = inlined_call_operand.vmem [shape: bf16[36,512], index: 1, kind: input, shape index: {}]
  %s2 = inlined_call_operand.vmem [shape: f32[8,1], index: 2, kind: input, shape index: {}]
  %s3 = inlined_call_operand.vmem [shape: f32[8,512], index: 3, kind: output, shape index: {}]
  %s4 = sld [smem:[#allocation0]]
  $region83: #{conv_block.1} parent=0
    _
  %s6 = ssub.s32 1, %s4
  %s7 = scalar_select 0, %s6, %s4
  $region1: #{conv_block.1} parent=0
    #allocation2 [shape = 'u8[40960]{0}', space=vmem, size = 0xa000, scoped, tag = 'input window, operand 1']
    loop: start=0, step=1, limit=4
    $region2: #{conv_block.1} parent=1 // loop_pre_header
      _
    $region3: #{conv_block.1} parent=1 // loop_header
      %s9 = sphi 0, %s13
      %p10 = scmp.ge.s32.totalorder %s9, 4
      %s17 = sphi 0, %s17
      %s19 = sphi 0, %s17
      %s20 = sphi 0, %s19
      %s34 = sphi 0, %s20
      %s40 = sphi 0, %s42
      %s43 = sphi 0, %s40
      %s44 = sphi 0, %s43
      %s60 = sphi 0, %s44
      %s64 = sphi 0, %s64
      %s66 = sphi 0, %s64
      %s67 = sphi 0, %s66
      %s81 = sphi 0, %s67
      %s87 = sphi 0, %s89
      %s90 = sphi 0, %s87
      %s91 = sphi 0, %s90
      %s107 = sphi 0, %s91
    $region4: #{conv_block.1} parent=1 // loop_header_branch
      %12 = sbr.rel (%p10) target = $region8
    $region5: #{conv_block.1} parent=1 // loop_body
      %s14 = ssub.s32 %s9, 1
      %s15 = ssub.s32 %s9, 2
      %s16 = sadd.s32 %s9, 1
      %s18 = sadd.s32 %s17, 1
      %p21 = scmp.eq.s32.totalorder %s9, 1
      %p22 = scmp.ne.s32.totalorder %s17, %s19
      %p23 = scmp.eq.s32.totalorder %s9, 0
      %p24 = por %p22, %p23
      %p25 = scmp.ne.s32.totalorder %s17, %s19
      %p26 = scmp.eq.s32.totalorder %s14, 1
      %p27 = por %p25, %p26
      %p28 = scmp.ne.s32.totalorder %s19, %s20
      %p29 = scmp.eq.s32.totalorder %s14, 0
      %p30 = por %p28, %p29
      %p31 = scmp.ne.s32.totalorder %s19, %s20
      %p32 = scmp.eq.s32.totalorder %s15, 1
      %p33 = por %p31, %p32
      %p35 = scmp.ne.s32.totalorder %s20, %s34
      %p36 = scmp.eq.s32.totalorder %s15, 0
      %p37 = por %p35, %p36
      %s38 = ssub.s32 %s9, %s16
      %p39 = scmp.eq.s32.totalorder %s38, 0
      %s41 = sadd.s32 %s40, 1
      %s42 = scalar_select %p39, %s40, %s41
      %p45 = pneg %p39
      %p46 = scmp.eq.s32.totalorder %s9, 1
      %p47 = por %p45, %p46
      %p48 = scmp.ne.s32.totalorder %s40, %s43
      %p49 = scmp.eq.s32.totalorder %s9, 0
      %p50 = por %p48, %p49
      %p51 = scmp.ne.s32.totalorder %s40, %s43
      %p52 = scmp.eq.s32.totalorder %s14, 1
      %p53 = por %p51, %p52
      %p54 = scmp.ne.s32.totalorder %s43, %s44
      %p55 = scmp.eq.s32.totalorder %s14, 0
      %p56 = por %p54, %p55
      %p57 = scmp.ne.s32.totalorder %s43, %s44
      %p58 = scmp.eq.s32.totalorder %s15, 1
      %p59 = por %p57, %p58
      %p61 = scmp.ne.s32.totalorder %s44, %s60
      %p62 = scmp.eq.s32.totalorder %s15, 0
      %p63 = por %p61, %p62
      %s65 = sadd.s32 %s64, 1
      %p68 = scmp.eq.s32.totalorder %s9, 1
      %p69 = scmp.ne.s32.totalorder %s64, %s66
      %p70 = scmp.eq.s32.totalorder %s9, 0
      %p71 = por %p69, %p70
      %p72 = scmp.ne.s32.totalorder %s64, %s66
      %p73 = scmp.eq.s32.totalorder %s14, 1
      %p74 = por %p72, %p73
      %p75 = scmp.ne.s32.totalorder %s66, %s67
      %p76 = scmp.eq.s32.totalorder %s14, 0
      %p77 = por %p75, %p76
      %p78 = scmp.ne.s32.totalorder %s66, %s67
      %p79 = scmp.eq.s32.totalorder %s15, 1
      %p80 = por %p78, %p79
      %p82 = scmp.ne.s32.totalorder %s67, %s81
      %p83 = scmp.eq.s32.totalorder %s15, 0
      %p84 = por %p82, %p83
      %s85 = ssub.s32 %s9, %s16
      %p86 = scmp.eq.s32.totalorder %s85, 0
      %s88 = sadd.s32 %s87, 1
      %s89 = scalar_select %p86, %s87, %s88
      %p92 = pneg %p86
      %p93 = scmp.eq.s32.totalorder %s9, 1
      %p94 = por %p92, %p93
      %p95 = scmp.ne.s32.totalorder %s87, %s90
      %p96 = scmp.eq.s32.totalorder %s9, 0
      %p97 = por %p95, %p96
      %p98 = scmp.ne.s32.totalorder %s87, %s90
      %p99 = scmp.eq.s32.totalorder %s14, 1
      %p100 = por %p98, %p99
      %p101 = scmp.ne.s32.totalorder %s90, %s91
      %p102 = scmp.eq.s32.totalorder %s14, 0
      %p103 = por %p101, %p102
      %p104 = scmp.ne.s32.totalorder %s90, %s91
      %p105 = scmp.eq.s32.totalorder %s15, 1
      %p106 = por %p104, %p105
      %p108 = scmp.ne.s32.totalorder %s91, %s107
      %p109 = scmp.eq.s32.totalorder %s15, 0
      %p110 = por %p108, %p109
      %p111 = scmp.le.s32.totalorder 1, %s9
      %p112 = scmp.lt.s32.totalorder %s9, 3
      %p113 = pnand %p111, %p112
      %p114 = pneg %p113
      // Predicated region
      $region9: #{conv_block.1} parent=5 // pred_check
        _
      $region10: #{conv_block.1} parent=5 // pred_check_branch
        %116 = sbr.rel (%p113) target = $region12
      $region11: #{conv_block.1} parent=5 // pred_region
        %s117 = ssub.s32 %s9, 1
        // Predicated region
        $region13: #{conv_block.1} parent=11 // pred_check
          %p118 = pneg %p30
        $region14: #{conv_block.1} parent=11 // pred_check_branch
          %120 = sbr.rel (%p118) target = $region16
        $region15: #{conv_block.1} parent=11 // pred_region
          _
        $region16: #{conv_block.1} parent=11 // pred_fallthru
          _
        // Predicated region
        $region17: #{conv_block.1} parent=11 // pred_check
          %p121 = pneg %p77
        $region18: #{conv_block.1} parent=11 // pred_check_branch
          %123 = sbr.rel (%p121) target = $region20
        $region19: #{conv_block.1} parent=11 // pred_region
          _
        $region20: #{conv_block.1} parent=11 // pred_fallthru
          _
      $region12: #{conv_block.1} parent=5 // pred_fallthru
        _
      %p124 = scmp.lt.s32.totalorder %s9, 2
      // Predicated region
      $region21: #{conv_block.1} parent=5 // pred_check
        %p125 = pneg %p124
      $region22: #{conv_block.1} parent=5 // pred_check_branch
        %127 = sbr.rel (%p125) target = $region24
      $region23: #{conv_block.1} parent=5 // pred_region
        // Predicated region
        $region25: #{conv_block.1} parent=23 // pred_check
          %p128 = pneg %p50
        $region26: #{conv_block.1} parent=23 // pred_check_branch
          %130 = sbr.rel (%p128) target = $region28
        $region27: #{conv_block.1} parent=23 // pred_region
          %s131 = sand.u32 %s40, 1
          %s132 = sand.u32 %s40, 1
          %s133 = smul.addr %s132, 40
          %s134 = scalar_lea.vmem [#allocation2], %s133
          %s135 = smul.u32 2, %s9
          %s136 = smul.addr %s135, 4
          %s137 = scalar_lea.vmem %s1, %s136
          // Predicated region
          $region29: #{conv_block.1} parent=27 // pred_check
            _
          $region30: #{conv_block.1} parent=27 // pred_check_branch
            %139 = sbr.rel (0) target = $region32
          $region31: #{conv_block.1} parent=27 // pred_region
            // Predicated region
            $region33: #{conv_block.1} parent=31 // pred_check
              _
            $region34: #{conv_block.1} parent=31 // pred_check_branch
              %141 = sbr.rel (0) target = $region36
            $region35: #{conv_block.1} parent=31 // pred_region
              // Predicated region
              $region48: #{conv_block.1} parent=35 // pred_check
                _
              $region49: #{conv_block.1} parent=35 // pred_check_branch
                %164 = sbr.rel (0) target = $region51
              $region50: #{conv_block.1} parent=35 // pred_region
                loop: start=0, step=1, limit=1
                $region52: #{conv_block.1} parent=50 // loop_pre_header
                  _
                $region53: #{conv_block.1} parent=50 // loop_header
                  %s166 = sphi 0, %s170
                  %p167 = scmp.ge.s32.totalorder %s166, 1
                  %s171 = sphi %s137, %s137
                  %s172 = sphi %s134, %s134
                $region54: #{conv_block.1} parent=50 // loop_header_branch
                  %169 = sbr.rel (%p167) target = $region58
                $region55: #{conv_block.1} parent=50 // loop_body
                  %v173 = vld [vmem:[%s171] sm:$0xff]
                  %174 = vst [vmem:[%s172] sm:$0xff] %v173
                  %v175 = vld [vmem:[%s171 + $0x10] sm:$0xff]
                  %176 = vst [vmem:[%s172 + $0x8] sm:$0xff] %v175
                  %v177 = vld [vmem:[%s171 + $0x20] sm:$0xff]
                  %178 = vst [vmem:[%s172 + $0x10] sm:$0xff] %v177
                  %v179 = vld [vmem:[%s171 + $0x30] sm:$0xff]
                  %180 = vst [vmem:[%s172 + $0x18] sm:$0xff] %v179
                  %v181 = vld [vmem:[%s171 + $0x40] sm:$0xff]
                  %182 = vst [vmem:[%s172 + $0x20] sm:$0xff] %v181
                $region56: #{conv_block.1} parent=50 // loop_footer
                  %s170 = sadd.s32 1, %s166
                $region57: #{conv_block.1} parent=50 // loop_footer_branch
                  %165 = sbr.rel target = $region53
                $region58: #{conv_block.1} parent=50 // loop_exit
                  _
              $region51: #{conv_block.1} parent=35 // pred_fallthru
                _
              // Predicated region
              $region59: #{conv_block.1} parent=35 // pred_check
                _
              $region60: #{conv_block.1} parent=35 // pred_check_branch
                %184 = sbr.rel target = $region62
              $region61: #{conv_block.1} parent=35 // pred_region
                _
              $region62: #{conv_block.1} parent=35 // pred_fallthru
                _
            $region36: #{conv_block.1} parent=31 // pred_fallthru
              _
            // Predicated region
            $region37: #{conv_block.1} parent=31 // pred_check
              _
            $region38: #{conv_block.1} parent=31 // pred_check_branch
              %143 = sbr.rel target = $region40
            $region39: #{conv_block.1} parent=31 // pred_region
              loop: start=0, step=1, limit=1
              $region41: #{conv_block.1} parent=39 // loop_pre_header
                _
              $region42: #{conv_block.1} parent=39 // loop_header
                %s146 = sphi 0, %s150
                %p147 = scmp.ge.s32.totalorder %s146, 1
                %s151 = sphi %s137, %s137
                %s152 = sphi %s134, %s134
              $region43: #{conv_block.1} parent=39 // loop_header_branch
                %149 = sbr.rel (%p147) target = $region47
              $region44: #{conv_block.1} parent=39 // loop_body
                %v153 = vld [vmem:[%s151] sm:$0xff]
                %154 = vst [vmem:[%s152] sm:$0xff] %v153
                %v155 = vld [vmem:[%s151 + $0x10] sm:$0xff]
                %156 = vst [vmem:[%s152 + $0x8] sm:$0xff] %v155
                %v157 = vld [vmem:[%s151 + $0x20] sm:$0xff]
                %158 = vst [vmem:[%s152 + $0x10] sm:$0xff] %v157
                %v159 = vld [vmem:[%s151 + $0x30] sm:$0xff]
                %160 = vst [vmem:[%s152 + $0x18] sm:$0xff] %v159
                %v161 = vld [vmem:[%s151 + $0x40] sm:$0xff]
                %162 = vst [vmem:[%s152 + $0x20] sm:$0xff] %v161
              $region45: #{conv_block.1} parent=39 // loop_footer
                %s150 = sadd.s32 1, %s146
              $region46: #{conv_block.1} parent=39 // loop_footer_branch
                %145 = sbr.rel target = $region42
              $region47: #{conv_block.1} parent=39 // loop_exit
                _
            $region40: #{conv_block.1} parent=31 // pred_fallthru
              _
          $region32: #{conv_block.1} parent=27 // pred_fallthru
            _
          %185 = vnop
        $region28: #{conv_block.1} parent=23 // pred_fallthru
          _
      $region24: #{conv_block.1} parent=5 // pred_fallthru
        _
      %p186 = scmp.le.s32.totalorder 1, %s9
      %p187 = scmp.lt.s32.totalorder %s9, 3
      %p188 = pnand %p186, %p187
      %p189 = pneg %p188
      // Predicated region
      $region63: #{conv_block.1} parent=5 // pred_check
        _
      $region64: #{conv_block.1} parent=5 // pred_check_branch
        %191 = sbr.rel (%p188) target = $region66
      $region65: #{conv_block.1} parent=5 // pred_region
        %s192 = ssub.s32 %s9, 1
        %s193 = sand.u32 %s43, 1
        %s194 = sand.u32 %s43, 1
        %s195 = smul.addr %s194, 40
        %s196 = scalar_lea.vmem [#allocation2], %s195
        // Predicated region
        $region67: #{conv_block.1} parent=65 // pred_check
          %p197 = pneg %p56
        $region68: #{conv_block.1} parent=65 // pred_check_branch
          %199 = sbr.rel (%p197) target = $region70
        $region69: #{conv_block.1} parent=65 // pred_region
          _
        $region70: #{conv_block.1} parent=65 // pred_fallthru
          _
        %p200 = pneg %p30
        %p201 = pneg %p27
        %s202 = sand.u32 %s43, 1
        %s203 = sand.u32 %s43, 1
        %s204 = smul.addr %s203, 40
        %s205 = scalar_lea.vmem [#allocation2], %s204
        %p206 = pneg %p56
        %p207 = pneg %p53
        %p208 = pneg %p77
        %p209 = pneg %p74
        %p210 = pneg %p103
        %p211 = pneg %p100
        %s212 = smul.u32 2, %s14
        %p213 = scmp.lt.s32.totalorder %s212, 3
        %s214 = scalar_select %p213, %s212, 3
        %s215 = smul.addr %s214, 8
        %s216 = scalar_lea.vmem %s3, %s215
        %s217 = smul.u32 2, %s14
        %s218 = smul.u32 2, %s14
        %p219 = scmp.lt.s32.totalorder %s218, 3
        %s220 = scalar_select %p219, %s218, 3
        %s221 = smul.addr %s220, 8
        %s222 = scalar_lea.vmem %s3, %s221
        %s223 = smul.u32 2, %s14
        %v225 = vld [vmem:[%s0] sm:$0xf]
        %v226 = vld [vmem:[%s196] sm:$0xff]
        %v227 = vld [vmem:[%s196 + $0x8] sm:$0xff]
        %v228 = vld [vmem:[%s196 + $0x10] sm:$0xff]
        %v229 = vld [vmem:[%s196 + $0x18] sm:$0xff]
        %v230 = vld [vmem:[%s196 + $0x20] sm:$0x33]
        %v231 = vld [vmem:[%s2] sm:$0xff]
        %233 = vset.pattern.permute.xlu0 0
        %234 = vperm.xlu0 %233, %v231
        %v235 = vpop.permute.xlu0 %234
        %v242 = vunpack.c.l.b16 %v226
        %v243 = vunpack.c.h.b16 %v226
        %v244 = vunpack.c.l.b16 %v227
        %v245 = vunpack.c.h.b16 %v227
        %v246 = vunpack.c.l.b16 %v228
        %v247 = vunpack.c.h.b16 %v228
        %v248 = vunpack.c.l.b16 %v229
        %v249 = vunpack.c.h.b16 %v229
        %v250 = vunpack.c.l.b16 %v230
        %v251 = vunpack.c.h.b16 %v230
        %v252 = vpack.c.b16 %v244, %v242
        %v253 = vpack.c.b16 %v245, %v243
        %v254 = vpack.c.b16 %v248, %v246
        %v255 = vpack.c.b16 %v249, %v247
        %v256 = vpack.c.b16 %v250, %v250
        %v257 = vpack.c.b16 %v251, %v251
        %vm262 = vcmask 293888
        %v264 = vsel %vm262, %v225, 0
        %vm266 = vcmask 1041408
        %v268 = vsel %vm266, %v256, 0
        %v271 = vsel %vm266, %v257, 0
        %273 = vmatprep.subr.bf16.mxu0 %v253
        %274 = vmatpush1.bf16.msra.mxu0 %v252
        %275 = vmatprep.subr.bf16.mxu0 %v255
        %276 = vmatpush1.bf16.msra.mxu0 %v254
        %277 = vmatprep.subr.bf16.mxu0 %v271
        %278 = vmatpush1.bf16.msra.mxu0 %v268
        %279 = vmatprep.subr.bf16.mxu0 0
        %280 = vmatpush1.bf16.msra.mxu0 0
        %281 = vmatprep.subr.bf16.mxu0 0
        %282 = vmatpush1.bf16.msra.mxu0 0
        %283 = vmatprep.subr.bf16.mxu0 0
        %284 = vmatpush1.bf16.msra.mxu0 0
        %285 = vmatprep.subr.bf16.mxu0 0
        %286 = vmatpush1.bf16.msra.mxu0 0
        %287 = vmatprep.subr.bf16.mxu0 0
        %288 = vmatpush1.bf16.msra.mxu0 0
        %289 = vmatprep.subr.bf16.mxu0 0
        %290 = vmatpush1.bf16.msra.mxu0 0
        %291 = vmatprep.subr.bf16.mxu0 0
        %292 = vmatpush1.bf16.msra.mxu0 0
        %293 = vmatprep.subr.bf16.mxu0 0
        %294 = vmatpush1.bf16.msra.mxu0 0
        %295 = vmatprep.subr.bf16.mxu0 0
        %296 = vmatpush1.bf16.msra.mxu0 0
        %297 = vmatprep.subr.bf16.mxu0 0
        %298 = vmatpush1.bf16.msra.mxu0 0
        %299 = vmatprep.subr.bf16.mxu0 0
        %300 = vmatpush1.bf16.msra.mxu0 0
        %301 = vmatprep.subr.bf16.mxu0 0
        %302 = vmatpush1.bf16.msra.mxu0 0
        %303 = vmatprep.subr.bf16.mxu0 0
        %304 = vmatpush1.bf16.msra.mxu0 0
        %305 = vmatprep.mubr.bf16.mxu0 0
        %306 = vmatmul.mubr.bf16.gmra.mrb[0].mxu0 %v264
        %v307 = vpop.f32.mrb[0].mxu0
        %v308 = vadd.f32 %v235, %v307
        %v309 = vpop.f32.mrb[0].mxu0
        %v310 = vadd.f32 %v235, %v309
        %v311 = vpop.f32.mrb[0].mxu0
        %v312 = vpop.f32.mrb[0].mxu0
        %313 = vdwg.mxu0
        %vm314 = vcmp.gt.f32.partialorder %v308, 0.0
        %vm315 = vcmp.gt.f32.partialorder %v310, 0.0
        %v316 = vmul.f32 %v308, 0.1
        %v317 = vmul.f32 %v310, 0.1
        %v318 = vsel %vm314, %v308, %v316
        %v319 = vsel %vm315, %v310, %v317
        %320 = vst [vmem:[%s222] sm:$0xff] %v318
        %321 = vst [vmem:[%s222 + $0x8] sm:$0xff] %v319
        %s322 = smul.u32 2, %s14
        %p323 = scmp.lt.s32.totalorder %s322, 3
        %s324 = scalar_select %p323, %s322, 3
        %s325 = smul.addr %s324, 8
        %s326 = scalar_lea.vmem %s3, %s325
        // Predicated region
        $region71: #{conv_block.1} parent=65 // pred_check
          %p327 = pneg %p100
        $region72: #{conv_block.1} parent=65 // pred_check_branch
          %329 = sbr.rel (%p327) target = $region74
        $region73: #{conv_block.1} parent=65 // pred_region
          %s330 = smul.u32 2, %s14
        $region74: #{conv_block.1} parent=65 // pred_fallthru
          _
      $region66: #{conv_block.1} parent=5 // pred_fallthru
        _
      %p331 = scmp.le.s32.totalorder 2, %s9
      // Predicated region
      $region75: #{conv_block.1} parent=5 // pred_check
        %p332 = pneg %p331
      $region76: #{conv_block.1} parent=5 // pred_check_branch
        %334 = sbr.rel (%p332) target = $region78
      $region77: #{conv_block.1} parent=5 // pred_region
        %s335 = ssub.s32 %s9, 2
        // Predicated region
        $region79: #{conv_block.1} parent=77 // pred_check
          %p336 = pneg %p106
        $region80: #{conv_block.1} parent=77 // pred_check_branch
          %338 = sbr.rel (%p336) target = $region82
        $region81: #{conv_block.1} parent=77 // pred_region
          %s339 = smul.u32 2, %s15
          %p340 = scmp.lt.s32.totalorder %s339, 3
          %s341 = scalar_select %p340, %s339, 3
          %s342 = smul.addr %s341, 8
          %s343 = scalar_lea.vmem %s3, %s342
        $region82: #{conv_block.1} parent=77 // pred_fallthru
          _
      $region78: #{conv_block.1} parent=5 // pred_fallthru
        _
    $region6: #{conv_block.1} parent=1 // loop_footer
      %s13 = sadd.s32 1, %s9
    $region7: #{conv_block.1} parent=1 // loop_footer_branch
      %8 = sbr.rel target = $region3
    $region8: #{conv_block.1} parent=1 // loop_exit
      _

</llo_original>
